<compile_context>
chip_gen: v7x
topology: tpu7x:2x2x1
jax: 0.10.0
libtpu: 0.0.40
codegen_flags: <defaults>
</compile_context>

<pallas_src>
import math

import jax
import jax.numpy as jnp
from jax.experimental import pallas as pl
from jax.experimental.pallas import tpu as pltpu

LN_EPS = 1e-12                           # BERT-style LayerNorm eps (transformer.LayerNorm)
_TARGET_BLOCK_BYTES = 2 * 1024 * 1024    # ~2 MiB x-block per grid step (good v6e & v7x)


def _mention_type_encoder_kernel(ids_ref, x_ref, table_ref, gamma_ref, beta_ref, o_ref):
    # ids_ref:   (TM, 1)  int32   mention-type id per row
    # x_ref:     (TM, H)          mention embeddings (rows = flattened [*, S])
    # table_ref: (T, H)           full type-embedding table (VMEM-resident across steps)
    # gamma_ref: (1, H), beta_ref: (1, H)  LayerNorm affine params
    x = x_ref[...].astype(jnp.float32)                       # (TM, H)
    table = table_ref[...].astype(jnp.float32)               # (T, H)
    ids = ids_ref[...]                                       # (TM, 1) int32

    # Fused embedding gather: one-hot(ids) @ table on the (otherwise idle) MXU.
    tm = x.shape[0]
    num_types = table.shape[0]
    type_iota = jax.lax.broadcasted_iota(jnp.int32, (tm, num_types), 1)
    onehot = (ids == type_iota).astype(jnp.float32)          # (TM, T)
    type_emb = jnp.dot(onehot, table, preferred_element_type=jnp.float32)  # (TM, H)

    y = x + type_emb

    # LayerNorm over the hidden (last) axis — centered two-pass moments in f32.
    mean = jnp.mean(y, axis=-1, keepdims=True)
    centered = y - mean
    var = jnp.mean(centered * centered, axis=-1, keepdims=True)
    norm = centered * jax.lax.rsqrt(var + LN_EPS)

    gamma = gamma_ref[...].astype(jnp.float32)               # (1, H)
    beta = beta_ref[...].astype(jnp.float32)                 # (1, H)
    out = norm * gamma + beta

    # TODO(synk): nn.Dropout omitted (identity at inference / eval mode).
    o_ref[...] = out.astype(o_ref.dtype)


@jax.jit
def mention_type_encoder(batch_mention_emb, mention_type_ids, emb_table, ln_gamma, ln_beta):
    """batch_mention_emb: [*, S, H]; mention_type_ids: [*, S] int; emb_table: [T, H]."""
    orig_shape = batch_mention_emb.shape
    H = orig_shape[-1]
    N = math.prod(orig_shape[:-1])
    T = emb_table.shape[0]

    x2d = batch_mention_emb.reshape(N, H)
    ids2d = mention_type_ids.reshape(N, 1).astype(jnp.int32)
    gamma2d = ln_gamma.reshape(1, H)
    beta2d = ln_beta.reshape(1, H)

    # Row-tile size: as many rows as fit ~_TARGET_BLOCK_BYTES, rounded to a multiple of 8
    # (or full extent when N is small).
    bytes_per_row = H * batch_mention_emb.dtype.itemsize
    rows_target = max(1, _TARGET_BLOCK_BYTES // bytes_per_row)
    if N <= rows_target or N <= 8:
        tm = N                                   # single full-extent block
    else:
        tm = max(8, (min(N, rows_target) // 8) * 8)
    grid = (pl.cdiv(N, tm),)

    # Explicit VMEM budget: 2x double-buffered x + out blocks, resident table/params,
    # plus slack — comfortably under v7x's 64 MiB physical VMEM.
    block_bytes = tm * H * batch_mention_emb.dtype.itemsize
    vmem_limit = int(min(64 * 1024 * 1024, max(16 * 1024 * 1024, 8 * block_bytes)))

    out2d = pl.pallas_call(
        _mention_type_encoder_kernel,
        out_shape=jax.ShapeDtypeStruct((N, H), batch_mention_emb.dtype),
        grid_spec=pltpu.PrefetchScalarGridSpec(
            num_scalar_prefetch=0,
            grid=grid,
            in_specs=[
                pl.BlockSpec((tm, 1), lambda i: (i, 0)),   # mention-type ids
                pl.BlockSpec((tm, H), lambda i: (i, 0)),   # mention embeddings
                pl.BlockSpec((T, H), lambda i: (0, 0)),    # type table (VMEM-resident)
                pl.BlockSpec((1, H), lambda i: (0, 0)),    # LN gamma
                pl.BlockSpec((1, H), lambda i: (0, 0)),    # LN beta
            ],
            out_specs=pl.BlockSpec((tm, H), lambda i: (i, 0)),
        ),
        compiler_params=pltpu.CompilerParams(
            dimension_semantics=("parallel",),
            vmem_limit_bytes=vmem_limit,
        ),
    )(ids2d, x2d, emb_table, gamma2d, beta2d)

    return out2d.reshape(orig_shape)


def _reference(batch_mention_emb, mention_type_ids, emb_table, ln_gamma, ln_beta):
    type_emb = jnp.take(emb_table, mention_type_ids, axis=0)
    y = batch_mention_emb.astype(jnp.float32) + type_emb.astype(jnp.float32)
    mean = jnp.mean(y, axis=-1, keepdims=True)
    var = jnp.mean((y - mean) ** 2, axis=-1, keepdims=True)
    norm = (y - mean) * jax.lax.rsqrt(var + LN_EPS)
    return norm * ln_gamma + ln_beta


if __name__ == "__main__":
    # Small shapes consistent with the module: batch=2, seq=8, hidden=32, 8 mention types.
    B, S, H = 2, 8, 32
    NUM_MENT_TYPES = 8

    key = jax.random.PRNGKey(0)
    k_x, k_emb, k_ids = jax.random.split(key, 3)

    batch_mention_emb = jax.random.normal(k_x, (B, S, H), dtype=jnp.float32)

    # Deterministic synthetic parameters (not a checkpoint load):
    emb_table = jax.random.normal(k_emb, (NUM_MENT_TYPES, H), dtype=jnp.float32) * 0.02
    ln_gamma = jnp.ones((H,), dtype=jnp.float32)
    ln_beta = jnp.zeros((H,), dtype=jnp.float32)

    mention_type_ids = jax.random.randint(k_ids, (B, S), 0, NUM_MENT_TYPES, dtype=jnp.int32)

    out = mention_type_encoder(batch_mention_emb, mention_type_ids, emb_table, ln_gamma, ln_beta)
    out = jax.block_until_ready(out)

    ref = _reference(batch_mention_emb, mention_type_ids, emb_table, ln_gamma, ln_beta)
    assert out.shape == (B, S, H)
    assert jnp.allclose(out, ref, atol=1e-5, rtol=1e-5), "mismatch vs reference"

    print("KERNEL_OK")
</pallas_src>

<mosaic_0001>
module attributes {stable_mosaic.version = 11 : i64} {
  func.func @_mention_type_encoder_kernel(%arg0: i32, %arg1: memref<16x1xi32, #tpu.memory_space<vmem>>, %arg2: memref<16x32xf32, #tpu.memory_space<vmem>>, %arg3: memref<8x32xf32, #tpu.memory_space<vmem>>, %arg4: memref<1x32xf32, #tpu.memory_space<vmem>>, %arg5: memref<1x32xf32, #tpu.memory_space<vmem>>, %arg6: memref<16x32xf32, #tpu.memory_space<vmem>>) attributes {dimension_semantics = [#tpu.dimension_semantics<parallel>], iteration_bounds = array<i64: 1>, scalar_prefetch = 0 : i64, scratch_operands = 0 : i64, tpu.core_type = #tpu.core_type<tc>, window_params = [{transform_indices = @transform_0, window_bounds = array<i64: 16, 1>}, {transform_indices = @transform_1, window_bounds = array<i64: 16, 32>}, {pipeline_mode = #tpu.pipeline_mode<synchronous>, transform_indices = @transform_2, window_bounds = array<i64: 8, 32>}, {pipeline_mode = #tpu.pipeline_mode<synchronous>, transform_indices = @transform_3, window_bounds = array<i64: 1, 32>}, {pipeline_mode = #tpu.pipeline_mode<synchronous>, transform_indices = @transform_4, window_bounds = array<i64: 1, 32>}, {transform_indices = @transform_5, window_bounds = array<i64: 16, 32>}]} {
    %c0 = arith.constant 0 : index
    %c0_0 = arith.constant 0 : index
    %0 = vector.load %arg2[%c0, %c0_0] : memref<16x32xf32, #tpu.memory_space<vmem>>, vector<16x32xf32>
    %c0_1 = arith.constant 0 : index
    %c0_2 = arith.constant 0 : index
    %1 = vector.load %arg3[%c0_1, %c0_2] : memref<8x32xf32, #tpu.memory_space<vmem>>, vector<8x32xf32>
    %c0_3 = arith.constant 0 : index
    %c0_4 = arith.constant 0 : index
    %2 = vector.load %arg1[%c0_3, %c0_4] : memref<16x1xi32, #tpu.memory_space<vmem>>, vector<16x1xi32>
    %3 = tpu.iota {dimensions = array<i32: 1>} : vector<16x8xi32>
    %4 = vector.broadcast %2 : vector<16x1xi32> to vector<16x8xi32>
    %5 = arith.cmpi eq, %4, %3 : vector<16x8xi32>
    %6 = arith.extui %5 : vector<16x8xi1> to vector<16x8xi32>
    %7 = arith.sitofp %6 : vector<16x8xi32> to vector<16x8xf32>
    %cst = arith.constant dense<0.000000e+00> : vector<16x32xf32>
    %8 = tpu.matmul %7, %1, %cst {dimension_numbers = #tpu.dot_dimension_numbers<[1], [0], [0], [1], [0, 0, 1, 1], [], []>} : vector<16x8xf32>, vector<8x32xf32>, vector<16x32xf32> -> vector<16x32xf32>
    %9 = arith.addf %0, %8 : vector<16x32xf32>
    %cst_5 = arith.constant dense<0.000000e+00> : vector<16xf32>
    %10 = vector.multi_reduction <add>, %9, %cst_5 [1] : vector<16x32xf32> to vector<16xf32>
    %11 = vector.shape_cast %10 : vector<16xf32> to vector<16x1xf32>
    %cst_6 = arith.constant 3.200000e+01 : f32
    %12 = vector.broadcast %cst_6 : f32 to vector<16x1xf32>
    %13 = arith.divf %11, %12 : vector<16x1xf32>
    %14 = vector.broadcast %13 : vector<16x1xf32> to vector<16x32xf32>
    %15 = arith.subf %9, %14 : vector<16x32xf32>
    %16 = arith.mulf %15, %15 : vector<16x32xf32>
    %cst_7 = arith.constant dense<0.000000e+00> : vector<16xf32>
    %17 = vector.multi_reduction <add>, %16, %cst_7 [1] : vector<16x32xf32> to vector<16xf32>
    %18 = vector.shape_cast %17 : vector<16xf32> to vector<16x1xf32>
    %cst_8 = arith.constant 3.200000e+01 : f32
    %19 = vector.broadcast %cst_8 : f32 to vector<16x1xf32>
    %20 = arith.divf %18, %19 : vector<16x1xf32>
    %cst_9 = arith.constant 9.99999996E-13 : f32
    %21 = vector.broadcast %cst_9 : f32 to vector<16x1xf32>
    %22 = arith.addf %20, %21 : vector<16x1xf32>
    %23 = math.rsqrt %22 : vector<16x1xf32>
    %24 = vector.broadcast %23 : vector<16x1xf32> to vector<16x32xf32>
    %25 = arith.mulf %15, %24 : vector<16x32xf32>
    %c0_10 = arith.constant 0 : index
    %c0_11 = arith.constant 0 : index
    %26 = vector.load %arg4[%c0_10, %c0_11] : memref<1x32xf32, #tpu.memory_space<vmem>>, vector<1x32xf32>
    %c0_12 = arith.constant 0 : index
    %c0_13 = arith.constant 0 : index
    %27 = vector.load %arg5[%c0_12, %c0_13] : memref<1x32xf32, #tpu.memory_space<vmem>>, vector<1x32xf32>
    %28 = vector.broadcast %26 : vector<1x32xf32> to vector<16x32xf32>
    %29 = arith.mulf %25, %28 : vector<16x32xf32>
    %30 = vector.broadcast %27 : vector<1x32xf32> to vector<16x32xf32>
    %31 = arith.addf %29, %30 : vector<16x32xf32>
    %c0_14 = arith.constant 0 : index
    %c0_15 = arith.constant 0 : index
    %32 = vector.load %arg6[%c0_14, %c0_15] : memref<16x32xf32, #tpu.memory_space<vmem>>, vector<16x32xf32>
    tpu.vector_store %arg6[%c0_14, %c0_15], %31 {strides = array<i32>} : memref<16x32xf32, #tpu.memory_space<vmem>>, vector<16x32xf32>,
    return
  }
  func.func @transform_0(%arg0: i32) -> (i32, i32) {
    %c0_i32 = arith.constant 0 : i32
    %c0_i32_0 = arith.constant 0 : i32
    return %arg0, %c0_i32 : i32, i32
  }
  func.func @transform_1(%arg0: i32) -> (i32, i32) {
    %c0_i32 = arith.constant 0 : i32
    %c0_i32_0 = arith.constant 0 : i32
    return %arg0, %c0_i32 : i32, i32
  }
  func.func @transform_2(%arg0: i32) -> (i32, i32) {
    %c0_i32 = arith.constant 0 : i32
    %c0_i32_0 = arith.constant 0 : i32
    %c0_i32_1 = arith.constant 0 : i32
    return %c0_i32, %c0_i32_0 : i32, i32
  }
  func.func @transform_3(%arg0: i32) -> (i32, i32) {
    %c0_i32 = arith.constant 0 : i32
    %c0_i32_0 = arith.constant 0 : i32
    %c0_i32_1 = arith.constant 0 : i32
    return %c0_i32, %c0_i32_0 : i32, i32
  }
  func.func @transform_4(%arg0: i32) -> (i32, i32) {
    %c0_i32 = arith.constant 0 : i32
    %c0_i32_0 = arith.constant 0 : i32
    %c0_i32_1 = arith.constant 0 : i32
    return %c0_i32, %c0_i32_0 : i32, i32
  }
  func.func @transform_5(%arg0: i32) -> (i32, i32) {
    %c0_i32 = arith.constant 0 : i32
    %c0_i32_0 = arith.constant 0 : i32
    return %arg0, %c0_i32 : i32, i32
  }
}

</mosaic_0001>

<llo_original>
// kernel: mention_type_encoder.1
$region0: #{mention_type_encoder.1}
  #allocation0 [shape = 'u32[]', space=smem, size = 0x4, offset = 0x4, fixed_abs, tag = 'smem constant byte address 0x4 - core index']
  #allocation1 [shape = 'u32[144,128]{1,0:T(1,128)}', space=vmem, size = 0x12000, scoped, tag = 'internal scratch']
  %s0 = inlined_call_operand.vmem [shape: s32[16,1], index: 0, kind: input, shape index: {}]
  %s1 = inlined_call_operand.vmem [shape: f32[16,32], index: 1, kind: input, shape index: {}]
  %s2 = inlined_call_operand.vmem [shape: f32[8,32], index: 2, kind: input, shape index: {}]
  %s3 = inlined_call_operand.vmem [shape: f32[1,32], index: 3, kind: input, shape index: {}]
  %s4 = inlined_call_operand.vmem [shape: f32[1,32], index: 4, kind: input, shape index: {}]
  %s5 = inlined_call_operand.hbm [shape: f32[16,32], index: 5, kind: output, shape index: {}]
  %s6 = sld [smem:[#allocation0]]
  $region30: #{mention_type_encoder.1} parent=0
    _
  %s8 = ssub.s32 1, %s6
  %s9 = scalar_select 0, %s8, %s6
  $region1: #{mention_type_encoder.1} parent=0
    #allocation2 [shape = 'u8[8192]{0}', space=vmem, size = 0x2000, scoped, tag = 'output window, operand 0, single buffered']
    #allocation3 [shape = 's32[1]{0}', space=sflag, size = 0x4, scoped, tag = 'scoped memory for mention_type_encoder.1']
    %10 = vsyncpa [#allocation3], 0
    // Predicated region
    $region2: #{mention_type_encoder.1} parent=1 // pred_check
      _
    $region3: #{mention_type_encoder.1} parent=1 // pred_check_branch
      %12 = sbr.rel (0) target = $region5
    $region4: #{mention_type_encoder.1} parent=1 // pred_region
      _
    $region5: #{mention_type_encoder.1} parent=1 // pred_fallthru
      _
    // Predicated region
    $region6: #{mention_type_encoder.1} parent=1 // pred_check
      _
    $region7: #{mention_type_encoder.1} parent=1 // pred_check_branch
      %14 = sbr.rel (0) target = $region9
    $region8: #{mention_type_encoder.1} parent=1 // pred_region
      _
    $region9: #{mention_type_encoder.1} parent=1 // pred_fallthru
      _
    // Predicated region
    $region10: #{mention_type_encoder.1} parent=1 // pred_check
      _
    $region11: #{mention_type_encoder.1} parent=1 // pred_check_branch
      %16 = sbr.rel (0) target = $region13
    $region12: #{mention_type_encoder.1} parent=1 // pred_region
      _
    $region13: #{mention_type_encoder.1} parent=1 // pred_fallthru
      _
    // Predicated region
    $region14: #{mention_type_encoder.1} parent=1 // pred_check
      _
    $region15: #{mention_type_encoder.1} parent=1 // pred_check_branch
      %18 = sbr.rel (0) target = $region17
    $region16: #{mention_type_encoder.1} parent=1 // pred_region
      _
    $region17: #{mention_type_encoder.1} parent=1 // pred_fallthru
      _
    // Predicated region
    $region18: #{mention_type_encoder.1} parent=1 // pred_check
      _
    $region19: #{mention_type_encoder.1} parent=1 // pred_check_branch
      %20 = sbr.rel (0) target = $region21
    $region20: #{mention_type_encoder.1} parent=1 // pred_region
      _
    $region21: #{mention_type_encoder.1} parent=1 // pred_fallthru
      _
    %v21 = vld [vmem:[%s1] sm:$0xff]
    %v22 = vld [vmem:[%s1 + $0x8] sm:$0xff]
    %v23 = vld [vmem:[%s2] sm:$0xff]
    %v24 = vld [vmem:[%s0] sm:$0xff]
    %v25 = vld [vmem:[%s0 + $0x8] sm:$0xff]
    %v26 = vlaneseq
    %v27 = vand.u32 %v26, 127
    %28 = vset.pattern.permute.xlu0 0
    %29 = vperm.xlu0 %28, %v24
    %v30 = vpop.permute.xlu0 %29
    %31 = vset.pattern.permute.xlu0 0
    %32 = vperm.xlu0 %31, %v25
    %v33 = vpop.permute.xlu0 %32
    %vm34 = vcmp.eq.s32.totalorder %v30, %v27
    %vm35 = vcmp.eq.s32.totalorder %v33, %v27
    %v36 = vsel %vm34, 1, 0
    %v37 = vsel %vm35, 1, 0
    %v38 = vcvt.s32.f32 %v36
    %v39 = vcvt.s32.f32 %v37
    %vm40 = vcmask 64512
    %v42 = vsel %vm40, %v38, 0
    %v45 = vsel %vm40, %v39, 0
    %47 = vmatprep.subr.mxu0 0.0
    %48 = vmatpush1.msra.mxu0 %v23
    %49 = vmatprep.subr.mxu0 0.0
    %50 = vmatpush1.msra.mxu0 0.0
    %51 = vmatprep.subr.mxu0 0.0
    %52 = vmatpush1.msra.mxu0 0.0
    %53 = vmatprep.subr.mxu0 0.0
    %54 = vmatpush1.msra.mxu0 0.0
    %55 = vmatprep.subr.mxu0 0.0
    %56 = vmatpush1.msra.mxu0 0.0
    %57 = vmatprep.subr.mxu0 0.0
    %58 = vmatpush1.msra.mxu0 0.0
    %59 = vmatprep.subr.mxu0 0.0
    %60 = vmatpush1.msra.mxu0 0.0
    %61 = vmatprep.subr.mxu0 0.0
    %62 = vmatpush1.msra.mxu0 0.0
    %63 = vmatprep.subr.mxu0 0.0
    %64 = vmatpush1.msra.mxu0 0.0
    %65 = vmatprep.subr.mxu0 0.0
    %66 = vmatpush1.msra.mxu0 0.0
    %67 = vmatprep.subr.mxu0 0.0
    %68 = vmatpush1.msra.mxu0 0.0
    %69 = vmatprep.subr.mxu0 0.0
    %70 = vmatpush1.msra.mxu0 0.0
    %71 = vmatprep.subr.mxu0 0.0
    %72 = vmatpush1.msra.mxu0 0.0
    %73 = vmatprep.subr.mxu0 0.0
    %74 = vmatpush1.msra.mxu0 0.0
    %75 = vmatprep.subr.mxu0 0.0
    %76 = vmatpush1.msra.mxu0 0.0
    %77 = vmatprep.subr.mxu0 0.0
    %78 = vmatpush1.msra.mxu0 0.0
    %79 = vmatprep.subr.mxu0 0.0
    %80 = vmatpush1.msra.mxu0 0.0
    %81 = vmatprep.subr.mxu0 0.0
    %82 = vmatpush1.msra.mxu0 0.0
    %83 = vmatprep.subr.mxu0 0.0
    %84 = vmatpush1.msra.mxu0 0.0
    %85 = vmatprep.subr.mxu0 0.0
    %86 = vmatpush1.msra.mxu0 0.0
    %87 = vmatprep.subr.mxu0 0.0
    %88 = vmatpush1.msra.mxu0 0.0
    %89 = vmatprep.subr.mxu0 0.0
    %90 = vmatpush1.msra.mxu0 0.0
    %91 = vmatprep.subr.mxu0 0.0
    %92 = vmatpush1.msra.mxu0 0.0
    %93 = vmatprep.subr.mxu0 0.0
    %94 = vmatpush1.msra.mxu0 0.0
    %95 = vmatprep.subr.mxu0 0.0
    %96 = vmatpush1.msra.mxu0 0.0
    %97 = vmatprep.subr.mxu0 0.0
    %98 = vmatpush1.msra.mxu0 0.0
    %99 = vmatprep.subr.mxu0 0.0
    %100 = vmatpush1.msra.mxu0 0.0
    %101 = vmatprep.subr.mxu0 0.0
    %102 = vmatpush1.msra.mxu0 0.0
    %103 = vmatprep.subr.mxu0 0.0
    %104 = vmatpush1.msra.mxu0 0.0
    %105 = vmatprep.subr.mxu0 0.0
    %106 = vmatpush1.msra.mxu0 0.0
    %107 = vmatprep.subr.mxu0 0.0
    %108 = vmatpush1.msra.mxu0 0.0
    %109 = vmatprep.subr.mxu0 0.0
    %110 = vmatpush1.msra.mxu0 0.0
    %111 = vmatprep.mubr.f32.mxu0 0.0
    %112 = vmatmul.mubr.f32.gmra.mrb[0].mxu0 %v42
    %v113 = vpop.f32.mrb[0].mxu0
    %v114 = vadd.f32 0.0, %v113
    %v115 = vpop.f32.mrb[0].mxu0
    %116 = vmatprep.mubr.f32.mxu0 0.0
    %117 = vmatmul.mubr.f32.gmra.mrb[0].mxu0 %v45
    %v118 = vpop.f32.mrb[0].mxu0
    %v119 = vadd.f32 0.0, %v118
    %v120 = vpop.f32.mrb[0].mxu0
    %121 = vdwg.mxu0
    %v122 = vadd.f32 %v21, %v114
    %v123 = vadd.f32 %v22, %v119
    %vm124 = vcmask 261120
    %v125 = vsel %vm124, %v122, 0.0
    %126 = vadd.xlane.f32.xlu0 %v125
    %v127 = vpop.xlane.xlu0 %126
    %v128 = vsel %vm124, %v123, 0.0
    %129 = vadd.xlane.f32.xlu0 %v128
    %v130 = vpop.xlane.xlu0 %129
    %v131 = vrcp.pop 32.0
    %v132 = vmul.f32 %v127, %v131
    %v133 = vmul.f32 %v130, %v131
    %v134 = vsub.f32 %v122, %v132
    %v135 = vsub.f32 %v123, %v133
    %v136 = vmul.f32 %v134, %v134
    %v137 = vmul.f32 %v135, %v135
    %v138 = vsel %vm124, %v136, 0.0
    %139 = vadd.xlane.f32.xlu0 %v138
    %v140 = vpop.xlane.xlu0 %139
    %v141 = vsel %vm124, %v137, 0.0
    %142 = vadd.xlane.f32.xlu0 %v141
    %v143 = vpop.xlane.xlu0 %142
    %v144 = vmul.f32 %v140, %v131
    %v145 = vmul.f32 %v143, %v131
    %v146 = vadd.f32 %v144, 1e-12
    %v147 = vadd.f32 %v145, 1e-12
    %v148 = vrsqrt.pop %v146
    %v149 = vrsqrt.pop %v147
    %v150 = vmul.f32 %v134, %v148
    %v151 = vmul.f32 %v135, %v149
    %v152 = vld [vmem:[%s3] sm:$0x1]
    %v153 = vld [vmem:[%s4] sm:$0x1]
    %v155 = vlaneseq
    %v156 = vshrl.u32 %v155, 7
    %v157 = vsub.s32 0, %v156
    %v158 = vrot.slane %v152, %v157
    %v160 = vmul.f32 %v150, %v158
    %v161 = vmul.f32 %v151, %v158
    %v163 = vlaneseq
    %v164 = vshrl.u32 %v163, 7
    %v165 = vsub.s32 0, %v164
    %v166 = vrot.slane %v153, %v165
    %v168 = vadd.f32 %v160, %v166
    %v169 = vadd.f32 %v161, %v166
    %170 = vst.msk [vmem:[#allocation2] sm:$0xff] %vm124, %v168
    %171 = vst.msk [vmem:[#allocation2 + $0x8] sm:$0xff] %vm124, %v169
    // Predicated region
    $region22: #{mention_type_encoder.1} parent=1 // pred_check
      _
    $region23: #{mention_type_encoder.1} parent=1 // pred_check_branch
      %173 = sbr.rel (0) target = $region25
    $region24: #{mention_type_encoder.1} parent=1 // pred_region
      %s175 = ssub.s32 256, 256
      %176 = vsyncadd [#allocation3], %s175
      %s177 = sshll.u32 [#allocation2], 4
      %s178 = int_to_ptr.vmem [resolvable:$true] %s177
      %183 = dma.vmem_to_hbm [thread:$0]  %s178, 256, %s5, [#allocation3], 128, 128, 8
    $region25: #{mention_type_encoder.1} parent=1 // pred_fallthru
      _
    // Predicated region
    $region26: #{mention_type_encoder.1} parent=1 // pred_check
      _
    $region27: #{mention_type_encoder.1} parent=1 // pred_check_branch
      %185 = sbr.rel (0) target = $region29
    $region28: #{mention_type_encoder.1} parent=1 // pred_region
      %186 = dma.done [#allocation3], 256
    $region29: #{mention_type_encoder.1} parent=1 // pred_fallthru
      _
    %187 = vsyncpa [#allocation3], 1

</llo_original>
